<compile_context>
chip_gen: v6e
topology: v6e:2x2x1
jax: 0.10.0
libtpu: 0.0.40
codegen_flags: <defaults>
</compile_context>

<pallas_src>
import functools
import math

import jax
import jax.numpy as jnp
from jax import lax
from jax.experimental import pallas as pl
from jax.experimental.pallas import tpu as pltpu


def _cdiv(a, b):
    return -(-a // b)


def _xlogx(v):
    return v * math.log(v) if v > 0.0 else 0.0


def _label_smoothing_rows_kernel(logits_ref, tgt_ref, out_ref, *,
                                 confidence, smoothing_value,
                                 ignore_index, wrapped_ignore,
                                 sum_p_normal, sum_p_hits,
                                 plogp_normal, plogp_hits):
    x = logits_ref[...].astype(jnp.float32)        # (TB, V) upcast per tile after the DMA
    tb, v = x.shape
    tgt = tgt_ref[...]                             # (TB, 1) int32

    # log-normalizer of the softmax per row
    m = jnp.max(x, axis=1, keepdims=True)
    lse = m + jnp.log(jnp.sum(jnp.exp(x - m), axis=1, keepdims=True))

    # Fused weighted reduction: w_j = confidence at the target column, smoothing_value
    # elsewhere.  The iota is (1, V) (V/128 vregs) and broadcast-compares against the
    # (TB, 1) targets -- no (TB, V) int32 tile, one pass over x.
    col = lax.broadcasted_iota(jnp.int32, (1, v), 1)
    w = jnp.where(col == tgt, confidence, smoothing_value)      # (TB, V) via broadcast
    sum_wx = jnp.sum(w * x, axis=1, keepdims=True)              # (TB, 1)

    # Ignore column: wrapped_ignore is a compile-time int -> static slice, no mask pass.
    x_ign = x[:, wrapped_ignore:wrapped_ignore + 1]             # (TB, 1)

    hits_ign_col = tgt == wrapped_ignore    # target sits on the zeroed smoothing column
    is_ignored = tgt == ignore_index        # whole row masked to zero (batchmean still / B)

    # sum_j p_j x_j: w already equals p except at the ignore column, where p is 0 unless
    # the target IS that column (then the scatter re-sets it to confidence and w == p).
    sum_px = sum_wx - jnp.where(hits_ign_col, 0.0, smoothing_value * x_ign)
    # sum_j p_j  and  sum_j xlogy(p_j, p_j)  are compile-time constants per case
    sum_p = jnp.where(hits_ign_col, sum_p_hits, sum_p_normal)
    sum_plogp = jnp.where(hits_ign_col, plogp_hits, plogp_normal)

    # sum_j (p log p - p log_q) = sum_plogp - (sum_px - lse * sum_p)
    row_loss = sum_plogp - (sum_px - lse * sum_p)
    out_ref[...] = jnp.where(is_ignored, 0.0, row_loss)


def label_smoothing_loss(logits, target, *, label_smoothing, ignore_index=-100):
    """logits: (B, V) float (f32 or bf16), target: (B,) int. Returns scalar loss (f32)."""
    B, V = logits.shape
    assert 0.0 < label_smoothing <= 1.0
    if V <= 2:
        raise ValueError(f"tgt_vocab_size={V} must be > 2 (smoothing divides by V - 2)")
    if ignore_index >= V or (ignore_index < 0 and -ignore_index > V):
        # torch's one_hot[ignore_index] would raise IndexError; do not silently wrap.
        raise ValueError(f"ignore_index={ignore_index} out of range for vocab size {V}")

    confidence = 1.0 - label_smoothing
    smoothing_value = label_smoothing / (V - 2)
    wrapped_ignore = ignore_index % V

    plogp_normal = (V - 2) * _xlogx(smoothing_value) + _xlogx(confidence)
    plogp_hits = (V - 1) * _xlogx(smoothing_value) + _xlogx(confidence)
    sum_p_normal = (V - 2) * smoothing_value + confidence
    sum_p_hits = (V - 1) * smoothing_value + confidence

    # ---- batch-block size from the f32 working set ----------------------------------
    # Per row: double-buffered native-dtype input + ~4 f32-wide intermediates
    # (upcast x, x-m / exp, w, w*x).  24 MiB keeps us inside v7x's 64 MiB VMEM
    # (32 MiB scoped default) with headroom, and gives multi-MiB blocks on v5e/v6e.
    itemsize = jnp.dtype(logits.dtype).itemsize
    bytes_per_row = V * (2 * itemsize + 4 * 4)
    budget = 24 * 1024 * 1024
    tb = (budget // bytes_per_row) // 8 * 8
    tb = max(8, min(tb, 4096))
    tb = min(tb, _cdiv(B, 8) * 8)              # don't pad tiny batches up to a huge block
    if B > 8 and _cdiv(B, tb) < 2:             # keep >=2 grid steps for v7x's 2 TCs
        tb = max(8, _cdiv(_cdiv(B, 2), 8) * 8)
    grid = _cdiv(B, tb)
    b_pad = grid * tb

    # Logits stay UNPADDED (no HBM copy).  Only the tiny target vector is padded with
    # ignore_index so the ragged tail rows (whose logits reads are unspecified) are
    # masked to zero loss in-kernel.
    tgt = target.astype(jnp.int32)
    if b_pad != B:
        tgt = jnp.pad(tgt, (0, b_pad - B), constant_values=ignore_index)
    tgt2d = tgt.reshape(b_pad, 1)

    kernel = functools.partial(
        _label_smoothing_rows_kernel,
        confidence=confidence,
        smoothing_value=smoothing_value,
        ignore_index=ignore_index,
        wrapped_ignore=wrapped_ignore,
        sum_p_normal=sum_p_normal,
        sum_p_hits=sum_p_hits,
        plogp_normal=plogp_normal,
        plogp_hits=plogp_hits,
    )

    vmem_needed = tb * bytes_per_row + (2 << 20)
    compiler_params = pltpu.CompilerParams(
        dimension_semantics=("parallel",),
        vmem_limit_bytes=max(vmem_needed, 32 * 1024 * 1024),
    )

    row_losses = pl.pallas_call(
        kernel,
        out_shape=jax.ShapeDtypeStruct((b_pad, 1), jnp.float32),
        grid_spec=pltpu.PrefetchScalarGridSpec(
            num_scalar_prefetch=0,
            grid=(grid,),
            in_specs=[
                pl.BlockSpec((tb, V), lambda i: (i, 0)),   # logits tile (full vocab rows)
                pl.BlockSpec((tb, 1), lambda i: (i, 0)),   # per-row targets (padded)
            ],
            out_specs=pl.BlockSpec((tb, 1), lambda i: (i, 0)),
        ),
        compiler_params=compiler_params,
        cost_estimate=pl.CostEstimate(
            flops=7 * B * V,
            transcendentals=B * V,
            bytes_accessed=B * V * itemsize + b_pad * 4 + b_pad * 4,
        ),
    )(logits, tgt2d)

    # F.kl_div(..., reduction='batchmean') divides by the ORIGINAL batch size.
    return jnp.sum(row_losses) / B


def _reference(logits, target, *, label_smoothing, ignore_index=-100):
    """Pure-JAX reference with identical semantics (for correctness check)."""
    B, V = logits.shape
    confidence = 1.0 - label_smoothing
    smoothing_value = label_smoothing / (V - 2)
    log_q = jax.nn.log_softmax(logits.astype(jnp.float32), axis=1)
    col = jnp.arange(V)[None, :]
    tgt = target.astype(jnp.int32)[:, None]
    p = jnp.full((B, V), smoothing_value, jnp.float32)
    p = jnp.where(col == (ignore_index % V), 0.0, p)
    p = jnp.where(col == tgt, confidence, p)
    p = jnp.where(tgt == ignore_index, 0.0, p)
    p_log_p = jnp.where(p > 0.0, p * jnp.log(jnp.where(p > 0.0, p, 1.0)), 0.0)
    return jnp.sum(p_log_p - p * log_q) / B


if __name__ == "__main__":
    # Small, deterministic example: batch=8, vocab=128, label_smoothing=0.1.
    B, V = 8, 128
    label_smoothing = 0.1
    ignore_index = -100  # wraps to column 28 in the smoothing buffer (as in torch)

    key = jax.random.PRNGKey(0)
    k_logits, k_tgt, k_logits2, k_tgt2 = jax.random.split(key, 4)
    logits = jax.random.normal(k_logits, (B, V), dtype=jnp.float32)
    target = jax.random.randint(k_tgt, (B,), 0, V, dtype=jnp.int32)
    target = target.at[3].set(ignore_index)       # exercise the masked (ignored-row) path
    target = target.at[5].set(ignore_index % V)   # exercise target == wrapped-ignore column

    loss = jax.block_until_ready(
        label_smoothing_loss(logits, target,
                             label_smoothing=label_smoothing, ignore_index=ignore_index))
    ref = _reference(logits, target,
                     label_smoothing=label_smoothing, ignore_index=ignore_index)
    assert jnp.allclose(loss, ref, rtol=1e-5, atol=1e-4), (loss, ref)

    # bf16 ingestion path: no wrapper-side f32 pre-cast, kernel upcasts per tile after DMA.
    logits_bf16 = logits.astype(jnp.bfloat16)
    loss_bf16 = jax.block_until_ready(
        label_smoothing_loss(logits_bf16, target,
                             label_smoothing=label_smoothing, ignore_index=ignore_index))
    ref_bf16 = _reference(logits_bf16, target,
                          label_smoothing=label_smoothing, ignore_index=ignore_index)
    assert jnp.allclose(loss_bf16, ref_bf16, rtol=1e-4, atol=1e-3), (loss_bf16, ref_bf16)

    # Ragged batch (B not a multiple of the block): exercises the no-pad cdiv path with
    # in-kernel tail masking and a 2-step grid.
    B2 = 10
    logits2 = jax.random.normal(k_logits2, (B2, V), dtype=jnp.float32)
    target2 = jax.random.randint(k_tgt2, (B2,), 0, V, dtype=jnp.int32)
    target2 = target2.at[1].set(ignore_index)
    loss2 = jax.block_until_ready(
        label_smoothing_loss(logits2, target2,
                             label_smoothing=label_smoothing, ignore_index=ignore_index))
    ref2 = _reference(logits2, target2,
                      label_smoothing=label_smoothing, ignore_index=ignore_index)
    assert jnp.allclose(loss2, ref2, rtol=1e-5, atol=1e-4), (loss2, ref2)

    print("KERNEL_OK")
</pallas_src>

<mosaic_0001>
module attributes {stable_mosaic.version = 11 : i64} {
  func.func @_label_smoothing_rows_kernel(%arg0: i32, %arg1: memref<8x128xf32, #tpu.memory_space<vmem>>, %arg2: memref<8x1xi32, #tpu.memory_space<vmem>>, %arg3: memref<8x1xf32, #tpu.memory_space<vmem>>) attributes {dimension_semantics = [#tpu.dimension_semantics<parallel>], iteration_bounds = array<i64: 1>, scalar_prefetch = 0 : i64, scratch_operands = 0 : i64, tpu.core_type = #tpu.core_type<tc>, window_params = [{transform_indices = @transform_0, window_bounds = array<i64: 8, 128>}, {transform_indices = @transform_1, window_bounds = array<i64: 8, 1>}, {transform_indices = @transform_2, window_bounds = array<i64: 8, 1>}]} {
    %c0 = arith.constant 0 : index
    %c0_0 = arith.constant 0 : index
    %0 = vector.load %arg1[%c0, %c0_0] : memref<8x128xf32, #tpu.memory_space<vmem>>, vector<8x128xf32>
    %c0_1 = arith.constant 0 : index
    %c0_2 = arith.constant 0 : index
    %1 = vector.load %arg2[%c0_1, %c0_2] : memref<8x1xi32, #tpu.memory_space<vmem>>, vector<8x1xi32>
    %cst = arith.constant dense<0xFF800000> : vector<8xf32>
    %2 = vector.multi_reduction <maximumf>, %0, %cst [1] : vector<8x128xf32> to vector<8xf32>
    %3 = vector.shape_cast %2 : vector<8xf32> to vector<8x1xf32>
    %4 = vector.broadcast %3 : vector<8x1xf32> to vector<8x128xf32>
    %5 = arith.subf %0, %4 : vector<8x128xf32>
    %6 = math.exp %5 : vector<8x128xf32>
    %cst_3 = arith.constant dense<0.000000e+00> : vector<8xf32>
    %7 = vector.multi_reduction <add>, %6, %cst_3 [1] : vector<8x128xf32> to vector<8xf32>
    %8 = vector.shape_cast %7 : vector<8xf32> to vector<8x1xf32>
    %9 = math.log %8 : vector<8x1xf32>
    %10 = arith.addf %3, %9 : vector<8x1xf32>
    %11 = tpu.iota {dimensions = array<i32: 1>} : vector<1x128xi32>
    %12 = vector.broadcast %11 : vector<1x128xi32> to vector<8x128xi32>
    %13 = vector.broadcast %1 : vector<8x1xi32> to vector<8x128xi32>
    %14 = arith.cmpi eq, %12, %13 : vector<8x128xi32>
    %cst_4 = arith.constant 0.899999976 : f32
    %cst_5 = arith.constant 7.93650805E-4 : f32
    %15 = vector.broadcast %cst_4 : f32 to vector<8x128xf32>
    %16 = vector.broadcast %cst_5 : f32 to vector<8x128xf32>
    %17 = arith.select %14, %15, %16 : vector<8x128xi1>, vector<8x128xf32>
    %18 = arith.mulf %17, %0 : vector<8x128xf32>
    %cst_6 = arith.constant dense<0.000000e+00> : vector<8xf32>
    %19 = vector.multi_reduction <add>, %18, %cst_6 [1] : vector<8x128xf32> to vector<8xf32>
    %20 = vector.shape_cast %19 : vector<8xf32> to vector<8x1xf32>
    %21 = vector.extract_strided_slice %0 {offsets = [0, 28], sizes = [8, 1], strides = [1, 1]} : vector<8x128xf32> to vector<8x1xf32>
    %c28_i32 = arith.constant 28 : i32
    %22 = vector.broadcast %c28_i32 : i32 to vector<8x1xi32>
    %23 = arith.cmpi eq, %1, %22 : vector<8x1xi32>
    %c-100_i32 = arith.constant -100 : i32
    %24 = vector.broadcast %c-100_i32 : i32 to vector<8x1xi32>
    %25 = arith.cmpi eq, %1, %24 : vector<8x1xi32>
    %cst_7 = arith.constant 7.93650805E-4 : f32
    %26 = vector.broadcast %cst_7 : f32 to vector<8x1xf32>
    %27 = arith.mulf %26, %21 : vector<8x1xf32>
    %cst_8 = arith.constant 0.000000e+00 : f32
    %28 = vector.broadcast %cst_8 : f32 to vector<8x1xf32>
    %29 = arith.select %23, %28, %27 : vector<8x1xi1>, vector<8x1xf32>
    %30 = arith.subf %20, %29 : vector<8x1xf32>
    %cst_9 = arith.constant 1.0007937 : f32
    %cst_10 = arith.constant 1.000000e+00 : f32
    %31 = vector.broadcast %cst_9 : f32 to vector<8x1xf32>
    %32 = vector.broadcast %cst_10 : f32 to vector<8x1xf32>
    %33 = arith.select %23, %31, %32 : vector<8x1xi1>, vector<8x1xf32>
    %cst_11 = arith.constant -0.81437695 : f32
    %cst_12 = arith.constant -0.808711171 : f32
    %34 = vector.broadcast %cst_11 : f32 to vector<8x1xf32>
    %35 = vector.broadcast %cst_12 : f32 to vector<8x1xf32>
    %36 = arith.select %23, %34, %35 : vector<8x1xi1>, vector<8x1xf32>
    %37 = arith.mulf %10, %33 : vector<8x1xf32>
    %38 = arith.subf %30, %37 : vector<8x1xf32>
    %39 = arith.subf %36, %38 : vector<8x1xf32>
    %cst_13 = arith.constant 0.000000e+00 : f32
    %40 = vector.broadcast %cst_13 : f32 to vector<8x1xf32>
    %41 = arith.select %25, %40, %39 : vector<8x1xi1>, vector<8x1xf32>
    %c0_14 = arith.constant 0 : index
    %c0_15 = arith.constant 0 : index
    %42 = vector.load %arg3[%c0_14, %c0_15] : memref<8x1xf32, #tpu.memory_space<vmem>>, vector<8x1xf32>
    tpu.vector_store %arg3[%c0_14, %c0_15], %41 {strides = array<i32>} : memref<8x1xf32, #tpu.memory_space<vmem>>, vector<8x1xf32>,
    return
  }
  func.func @transform_0(%arg0: i32) -> (i32, i32) {
    %c0_i32 = arith.constant 0 : i32
    %c0_i32_0 = arith.constant 0 : i32
    return %arg0, %c0_i32 : i32, i32
  }
  func.func @transform_1(%arg0: i32) -> (i32, i32) {
    %c0_i32 = arith.constant 0 : i32
    %c0_i32_0 = arith.constant 0 : i32
    return %arg0, %c0_i32 : i32, i32
  }
  func.func @transform_2(%arg0: i32) -> (i32, i32) {
    %c0_i32 = arith.constant 0 : i32
    %c0_i32_0 = arith.constant 0 : i32
    return %arg0, %c0_i32 : i32, i32
  }
}

</mosaic_0001>

<llo_original>
// kernel: tpu_custom_call.1
$region0: #{tpu_custom_call.1}
  #allocation0 [shape = 'u32[]', space=smem, size = 0x4, offset = 0x4, fixed_abs, tag = 'smem constant byte address 0x4 - core index']
  #allocation1 [shape = 'u32[144,128]{1,0:T(1,128)}', space=vmem, size = 0x12000, scoped, tag = 'internal scratch']
  %s0 = inlined_call_operand.vmem [shape: f32[8,128], index: 0, kind: input, shape index: {}]
  %s1 = inlined_call_operand.vmem [shape: s32[8,1], index: 1, kind: input, shape index: {}]
  %s2 = inlined_call_operand.vmem [shape: f32[8,1], index: 2, kind: output, shape index: {}]
  %s3 = sld [smem:[#allocation0]]
  $region18: #{tpu_custom_call.1} parent=0
    _
  %s5 = ssub.s32 1, %s3
  %s6 = scalar_select 0, %s5, %s3
  // Predicated region
  $region2: #{tpu_custom_call.1} parent=0 // pred_check
    _
  $region3: #{tpu_custom_call.1} parent=0 // pred_check_branch
    %8 = sbr.rel (0) target = $region5
  $region4: #{tpu_custom_call.1} parent=0 // pred_region
    _
  $region5: #{tpu_custom_call.1} parent=0 // pred_fallthru
    _
  // Predicated region
  $region6: #{tpu_custom_call.1} parent=0 // pred_check
    _
  $region7: #{tpu_custom_call.1} parent=0 // pred_check_branch
    %10 = sbr.rel (0) target = $region9
  $region8: #{tpu_custom_call.1} parent=0 // pred_region
    _
  $region9: #{tpu_custom_call.1} parent=0 // pred_fallthru
    _
  %v11 = vld [vmem:[%s0] sm:$0xff]
  %v12 = vld [vmem:[%s1] sm:$0xff]
  %13 = vmax.xlane.f32.xlu0 %v11
  %v14 = vpop.xlane.xlu0 %13
  %v15 = vsub.f32 %v11, %v14
  %v16 = vmul.f32 %v15, 1.442695
  %v17 = vpow.pop %v16
  %18 = vadd.xlane.f32.xlu0 %v17
  %v19 = vpop.xlane.xlu0 %18
  %v20 = vlog2.pop %v19
  %v21 = vmul.f32 %v20, 0.6931472
  %v22 = vadd.f32 %v14, %v21
  %v23 = vlaneseq
  %v24 = vand.u32 %v23, 127
  %25 = vset.pattern.permute.xlu0 0
  %26 = vperm.xlu0 %25, %v12
  %v27 = vpop.permute.xlu0 %26
  %vm28 = vcmp.eq.s32.totalorder %v24, %v27
  %v29 = vsel %vm28, 0.9, 0.0007936508
  %v30 = vmul.f32 %v29, %v11
  %31 = vadd.xlane.f32.xlu0 %v30
  %v32 = vpop.xlane.xlu0 %31
  %vm33 = vcmp.eq.s32.totalorder %v12, 28
  %vm34 = vcmp.eq.s32.totalorder %v12, 4294967196
  %v35 = vmul.f32 %v11, 0.0007936508
  %37 = vrot.lane.b32.xlu0 %v35, 100
  %v38 = vpop.permute.xlu0 %37
  %v40 = vsel %vm33, 0.0, %v38
  %v41 = vsub.f32 %v32, %v40
  %v42 = vsel %vm33, 1.0007937, 1.0
  %v43 = vsel %vm33, -0.81437695, -0.8087112
  %v44 = vmul.f32 %v22, %v42
  %v45 = vsub.f32 %v41, %v44
  %v46 = vsub.f32 %v43, %v45
  %v47 = vsel %vm34, 0.0, %v46
  %vm48 = vcmask 7168
  %49 = vst.msk [vmem:[%s2] sm:$0xff] %vm48, %v47
  // Predicated region
  $region10: #{tpu_custom_call.1} parent=0 // pred_check
    _
  $region11: #{tpu_custom_call.1} parent=0 // pred_check_branch
    %51 = sbr.rel (0) target = $region13
  $region12: #{tpu_custom_call.1} parent=0 // pred_region
    _
  $region13: #{tpu_custom_call.1} parent=0 // pred_fallthru
    _
  // Predicated region
  $region14: #{tpu_custom_call.1} parent=0 // pred_check
    _
  $region15: #{tpu_custom_call.1} parent=0 // pred_check_branch
    %53 = sbr.rel (0) target = $region17
  $region16: #{tpu_custom_call.1} parent=0 // pred_region
    _
  $region17: #{tpu_custom_call.1} parent=0 // pred_fallthru
    _

</llo_original>
